<compile_context>
chip_gen: v7x
topology: tpu7x:2x2x1
jax: 0.10.0
libtpu: 0.0.40
codegen_flags: <defaults>
</compile_context>

<pallas_src>
import jax
import jax.numpy as jnp
from jax.experimental import pallas as pl
from jax.experimental.pallas import tpu as pltpu


def _embedding_kernel(x_ref, param_ref, out_ref):
    # x_ref:     (1, B, TS) int32  — this tile's indices (B on sublanes, sites on lanes)
    # param_ref: (TS, P, E) float32 — TS sites of the embedding table
    # out_ref:   (B, TS*E) float32  — lane-dense output slab for this tile
    B = x_ref.shape[1]
    TS, P, E = param_ref.shape

    x_blk = x_ref[0]                                    # (B, TS) int32

    # Static double loop (TS and P are small by construction): pure VPU
    # select-accumulate, no MXU, no dynamic slicing, no relayouts.
    for ts in range(TS):
        x_col = x_blk[:, ts:ts + 1]                     # (B, 1)
        site_tbl = param_ref[ts]                        # (P, E)
        acc = jnp.zeros((B, E), dtype=jnp.float32)
        for p in range(P):
            row = site_tbl[p:p + 1, :].astype(jnp.float32)   # (1, E)
            acc = acc + jnp.where(x_col == p, row, 0.0)      # (B, E)
        out_ref[:, ts * E:(ts + 1) * E] = acc.astype(out_ref.dtype)


def _choose_tile_sites(S, P, E, max_unroll_sites=64, max_block_bytes=1 << 20):
    """Pick TS = sites per grid step.

    Constraints / preferences:
      * TS divides S (no remainder handling needed),
      * output block (B, TS*E) is lane-dense: TS*E % 128 == 0 (or TS == S),
      * param block TS*P*E*4 bytes stays modest (VMEM budget, incl. v5e 16 MiB
        scoped default), TS small enough that the static unroll stays cheap,
      * keep >= 2 grid steps alive when possible (v7x megacore).
    """
    divs = [d for d in range(1, S + 1) if S % d == 0]
    ok = [d for d in divs
          if ((d * E) % 128 == 0 or d == S)
          and d <= max_unroll_sites
          and d * P * E * 4 <= max_block_bytes]
    if not ok:
        fallback = [d for d in divs if (d * E) % 128 == 0] or [S]
        return min(fallback)
    multi = [d for d in ok if S // d >= 2]
    return max(multi) if multi else max(ok)


def embedding_forward(x, parameter):
    """x: (B, S) int, parameter: (S, P, E) float32 -> (B, S, E) float32."""
    B, S = x.shape
    S2, P, E = parameter.shape
    assert S == S2, "x sites must match parameter sites"

    x = x.astype(jnp.int32)
    TS = _choose_tile_sites(S, P, E)
    num_tiles = S // TS

    # Per-tile index slabs: (num_tiles, B, TS).  Tiny array; the reshuffle cost
    # is ~1/E of the output size and removes all dynamic indexing in-kernel.
    x_tiles = jnp.transpose(x.reshape(B, num_tiles, TS), (1, 0, 2))

    cost = pl.CostEstimate(
        flops=2 * B * S * E * P,            # select + add per (b, s, e, p)
        transcendentals=0,
        bytes_accessed=4 * (S * P * E + B * S * E + B * S),
    )

    out_flat = pl.pallas_call(
        _embedding_kernel,
        out_shape=jax.ShapeDtypeStruct((B, S * E), parameter.dtype),
        grid_spec=pltpu.PrefetchScalarGridSpec(
            num_scalar_prefetch=0,
            grid=(num_tiles,),
            in_specs=[
                # this tile's indices: block dims (B, TS) equal the full dims
                pl.BlockSpec((1, B, TS), lambda t: (t, 0, 0)),
                # TS sites of the embedding table per step
                pl.BlockSpec((TS, P, E), lambda t: (t, 0, 0)),
            ],
            # lane-dense output slab: (B, TS*E) at lane offset t*TS*E
            out_specs=pl.BlockSpec((B, TS * E), lambda t: (0, t)),
        ),
        compiler_params=pltpu.CompilerParams(
            dimension_semantics=("parallel",),
        ),
        cost_estimate=cost,
    )(x_tiles, parameter)

    # Free reshape (row-major contiguous) — no transpose, no extra HBM pass.
    return out_flat.reshape(B, S, E)


if __name__ == "__main__":
    # Small, module-consistent shapes
    batch, sites, physical_dim, embedding_dim = 8, 8, 4, 32

    key = jax.random.PRNGKey(0)
    k_param, k_x = jax.random.split(key)

    # Deterministic "torch.randn"-like parameter init
    parameter = jax.random.normal(
        k_param, (sites, physical_dim, embedding_dim), dtype=jnp.float32
    )
    # Integer inputs in [0, physical_dim)
    x = jax.random.randint(k_x, (batch, sites), 0, physical_dim, dtype=jnp.int32)

    out = embedding_forward(x, parameter)
    out = jax.block_until_ready(out)

    # Pure-JAX reference of the PyTorch gather semantics
    ref = parameter[jnp.arange(sites)[None, :], x]        # (B, S, E)

    assert out.shape == (batch, sites, embedding_dim)
    assert out.dtype == jnp.float32
    assert jnp.allclose(out, ref, atol=1e-6, rtol=1e-6)

    print("KERNEL_OK")
</pallas_src>

<mosaic_0001>
module attributes {stable_mosaic.version = 11 : i64} {
  func.func @_embedding_kernel(%arg0: i32, %arg1: memref<1x8x4xi32, #tpu.memory_space<vmem>>, %arg2: memref<4x4x32xf32, #tpu.memory_space<vmem>>, %arg3: memref<8x128xf32, #tpu.memory_space<vmem>>) attributes {dimension_semantics = [#tpu.dimension_semantics<parallel>], iteration_bounds = array<i64: 2>, scalar_prefetch = 0 : i64, scratch_operands = 0 : i64, tpu.core_type = #tpu.core_type<tc>, window_params = [{transform_indices = @transform_0, window_bounds = array<i64: 1, 8, 4>}, {transform_indices = @transform_1, window_bounds = array<i64: 4, 4, 32>}, {transform_indices = @transform_2, window_bounds = array<i64: 8, 128>}]} {
    %c0 = arith.constant 0 : index
    %c0_0 = arith.constant 0 : index
    %c0_1 = arith.constant 0 : index
    %0 = vector.load %arg1[%c0, %c0_0, %c0_1] : memref<1x8x4xi32, #tpu.memory_space<vmem>>, vector<1x8x4xi32>
    %1 = vector.shape_cast %0 : vector<1x8x4xi32> to vector<8x4xi32>
    %2 = vector.extract_strided_slice %1 {offsets = [0, 0], sizes = [8, 1], strides = [1, 1]} : vector<8x4xi32> to vector<8x1xi32>
    %c0_2 = arith.constant 0 : index
    %c0_3 = arith.constant 0 : index
    %c0_4 = arith.constant 0 : index
    %3 = vector.load %arg2[%c0_2, %c0_3, %c0_4] : memref<4x4x32xf32, #tpu.memory_space<vmem>>, vector<1x4x32xf32>
    %4 = vector.shape_cast %3 : vector<1x4x32xf32> to vector<4x32xf32>
    %cst = arith.constant 0.000000e+00 : f32
    %5 = vector.broadcast %cst : f32 to vector<8x32xf32>
    %6 = vector.extract_strided_slice %4 {offsets = [0, 0], sizes = [1, 32], strides = [1, 1]} : vector<4x32xf32> to vector<1x32xf32>
    %c0_i32 = arith.constant 0 : i32
    %7 = vector.broadcast %c0_i32 : i32 to vector<8x1xi32>
    %8 = arith.cmpi eq, %2, %7 : vector<8x1xi32>
    %cst_5 = arith.constant 0.000000e+00 : f32
    %9 = vector.shape_cast %8 : vector<8x1xi1> to vector<8x1xi1>
    %10 = vector.broadcast %9 : vector<8x1xi1> to vector<8x32xi1>
    %11 = vector.shape_cast %6 : vector<1x32xf32> to vector<1x32xf32>
    %12 = vector.broadcast %11 : vector<1x32xf32> to vector<8x32xf32>
    %13 = vector.broadcast %cst_5 : f32 to vector<8x32xf32>
    %14 = arith.select %10, %12, %13 : vector<8x32xi1>, vector<8x32xf32>
    %15 = arith.addf %5, %14 : vector<8x32xf32>
    %16 = vector.extract_strided_slice %4 {offsets = [1, 0], sizes = [1, 32], strides = [1, 1]} : vector<4x32xf32> to vector<1x32xf32>
    %c1_i32 = arith.constant 1 : i32
    %17 = vector.broadcast %c1_i32 : i32 to vector<8x1xi32>
    %18 = arith.cmpi eq, %2, %17 : vector<8x1xi32>
    %cst_6 = arith.constant 0.000000e+00 : f32
    %19 = vector.shape_cast %18 : vector<8x1xi1> to vector<8x1xi1>
    %20 = vector.broadcast %19 : vector<8x1xi1> to vector<8x32xi1>
    %21 = vector.shape_cast %16 : vector<1x32xf32> to vector<1x32xf32>
    %22 = vector.broadcast %21 : vector<1x32xf32> to vector<8x32xf32>
    %23 = vector.broadcast %cst_6 : f32 to vector<8x32xf32>
    %24 = arith.select %20, %22, %23 : vector<8x32xi1>, vector<8x32xf32>
    %25 = arith.addf %15, %24 : vector<8x32xf32>
    %26 = vector.extract_strided_slice %4 {offsets = [2, 0], sizes = [1, 32], strides = [1, 1]} : vector<4x32xf32> to vector<1x32xf32>
    %c2_i32 = arith.constant 2 : i32
    %27 = vector.broadcast %c2_i32 : i32 to vector<8x1xi32>
    %28 = arith.cmpi eq, %2, %27 : vector<8x1xi32>
    %cst_7 = arith.constant 0.000000e+00 : f32
    %29 = vector.shape_cast %28 : vector<8x1xi1> to vector<8x1xi1>
    %30 = vector.broadcast %29 : vector<8x1xi1> to vector<8x32xi1>
    %31 = vector.shape_cast %26 : vector<1x32xf32> to vector<1x32xf32>
    %32 = vector.broadcast %31 : vector<1x32xf32> to vector<8x32xf32>
    %33 = vector.broadcast %cst_7 : f32 to vector<8x32xf32>
    %34 = arith.select %30, %32, %33 : vector<8x32xi1>, vector<8x32xf32>
    %35 = arith.addf %25, %34 : vector<8x32xf32>
    %36 = vector.extract_strided_slice %4 {offsets = [3, 0], sizes = [1, 32], strides = [1, 1]} : vector<4x32xf32> to vector<1x32xf32>
    %c3_i32 = arith.constant 3 : i32
    %37 = vector.broadcast %c3_i32 : i32 to vector<8x1xi32>
    %38 = arith.cmpi eq, %2, %37 : vector<8x1xi32>
    %cst_8 = arith.constant 0.000000e+00 : f32
    %39 = vector.shape_cast %38 : vector<8x1xi1> to vector<8x1xi1>
    %40 = vector.broadcast %39 : vector<8x1xi1> to vector<8x32xi1>
    %41 = vector.shape_cast %36 : vector<1x32xf32> to vector<1x32xf32>
    %42 = vector.broadcast %41 : vector<1x32xf32> to vector<8x32xf32>
    %43 = vector.broadcast %cst_8 : f32 to vector<8x32xf32>
    %44 = arith.select %40, %42, %43 : vector<8x32xi1>, vector<8x32xf32>
    %45 = arith.addf %35, %44 : vector<8x32xf32>
    %c0_9 = arith.constant 0 : index
    %c0_10 = arith.constant 0 : index
    %46 = vector.load %arg3[%c0_9, %c0_10] : memref<8x128xf32, #tpu.memory_space<vmem>>, vector<8x32xf32>
    tpu.vector_store %arg3[%c0_9, %c0_10], %45 {strides = array<i32>} : memref<8x128xf32, #tpu.memory_space<vmem>>, vector<8x32xf32>,
    %47 = vector.extract_strided_slice %1 {offsets = [0, 1], sizes = [8, 1], strides = [1, 1]} : vector<8x4xi32> to vector<8x1xi32>
    %c1 = arith.constant 1 : index
    %c0_11 = arith.constant 0 : index
    %c0_12 = arith.constant 0 : index
    %48 = vector.load %arg2[%c1, %c0_11, %c0_12] : memref<4x4x32xf32, #tpu.memory_space<vmem>>, vector<1x4x32xf32>
    %49 = vector.shape_cast %48 : vector<1x4x32xf32> to vector<4x32xf32>
    %cst_13 = arith.constant 0.000000e+00 : f32
    %50 = vector.broadcast %cst_13 : f32 to vector<8x32xf32>
    %51 = vector.extract_strided_slice %49 {offsets = [0, 0], sizes = [1, 32], strides = [1, 1]} : vector<4x32xf32> to vector<1x32xf32>
    %c0_i32_14 = arith.constant 0 : i32
    %52 = vector.broadcast %c0_i32_14 : i32 to vector<8x1xi32>
    %53 = arith.cmpi eq, %47, %52 : vector<8x1xi32>
    %cst_15 = arith.constant 0.000000e+00 : f32
    %54 = vector.shape_cast %53 : vector<8x1xi1> to vector<8x1xi1>
    %55 = vector.broadcast %54 : vector<8x1xi1> to vector<8x32xi1>
    %56 = vector.shape_cast %51 : vector<1x32xf32> to vector<1x32xf32>
    %57 = vector.broadcast %56 : vector<1x32xf32> to vector<8x32xf32>
    %58 = vector.broadcast %cst_15 : f32 to vector<8x32xf32>
    %59 = arith.select %55, %57, %58 : vector<8x32xi1>, vector<8x32xf32>
    %60 = arith.addf %50, %59 : vector<8x32xf32>
    %61 = vector.extract_strided_slice %49 {offsets = [1, 0], sizes = [1, 32], strides = [1, 1]} : vector<4x32xf32> to vector<1x32xf32>
    %c1_i32_16 = arith.constant 1 : i32
    %62 = vector.broadcast %c1_i32_16 : i32 to vector<8x1xi32>
    %63 = arith.cmpi eq, %47, %62 : vector<8x1xi32>
    %cst_17 = arith.constant 0.000000e+00 : f32
    %64 = vector.shape_cast %63 : vector<8x1xi1> to vector<8x1xi1>
    %65 = vector.broadcast %64 : vector<8x1xi1> to vector<8x32xi1>
    %66 = vector.shape_cast %61 : vector<1x32xf32> to vector<1x32xf32>
    %67 = vector.broadcast %66 : vector<1x32xf32> to vector<8x32xf32>
    %68 = vector.broadcast %cst_17 : f32 to vector<8x32xf32>
    %69 = arith.select %65, %67, %68 : vector<8x32xi1>, vector<8x32xf32>
    %70 = arith.addf %60, %69 : vector<8x32xf32>
    %71 = vector.extract_strided_slice %49 {offsets = [2, 0], sizes = [1, 32], strides = [1, 1]} : vector<4x32xf32> to vector<1x32xf32>
    %c2_i32_18 = arith.constant 2 : i32
    %72 = vector.broadcast %c2_i32_18 : i32 to vector<8x1xi32>
    %73 = arith.cmpi eq, %47, %72 : vector<8x1xi32>
    %cst_19 = arith.constant 0.000000e+00 : f32
    %74 = vector.shape_cast %73 : vector<8x1xi1> to vector<8x1xi1>
    %75 = vector.broadcast %74 : vector<8x1xi1> to vector<8x32xi1>
    %76 = vector.shape_cast %71 : vector<1x32xf32> to vector<1x32xf32>
    %77 = vector.broadcast %76 : vector<1x32xf32> to vector<8x32xf32>
    %78 = vector.broadcast %cst_19 : f32 to vector<8x32xf32>
    %79 = arith.select %75, %77, %78 : vector<8x32xi1>, vector<8x32xf32>
    %80 = arith.addf %70, %79 : vector<8x32xf32>
    %81 = vector.extract_strided_slice %49 {offsets = [3, 0], sizes = [1, 32], strides = [1, 1]} : vector<4x32xf32> to vector<1x32xf32>
    %c3_i32_20 = arith.constant 3 : i32
    %82 = vector.broadcast %c3_i32_20 : i32 to vector<8x1xi32>
    %83 = arith.cmpi eq, %47, %82 : vector<8x1xi32>
    %cst_21 = arith.constant 0.000000e+00 : f32
    %84 = vector.shape_cast %83 : vector<8x1xi1> to vector<8x1xi1>
    %85 = vector.broadcast %84 : vector<8x1xi1> to vector<8x32xi1>
    %86 = vector.shape_cast %81 : vector<1x32xf32> to vector<1x32xf32>
    %87 = vector.broadcast %86 : vector<1x32xf32> to vector<8x32xf32>
    %88 = vector.broadcast %cst_21 : f32 to vector<8x32xf32>
    %89 = arith.select %85, %87, %88 : vector<8x32xi1>, vector<8x32xf32>
    %90 = arith.addf %80, %89 : vector<8x32xf32>
    %c0_22 = arith.constant 0 : index
    %c32 = arith.constant 32 : index
    %91 = vector.load %arg3[%c0_22, %c32] : memref<8x128xf32, #tpu.memory_space<vmem>>, vector<8x32xf32>
    tpu.vector_store %arg3[%c0_22, %c32], %90 {strides = array<i32>} : memref<8x128xf32, #tpu.memory_space<vmem>>, vector<8x32xf32>,
    %92 = vector.extract_strided_slice %1 {offsets = [0, 2], sizes = [8, 1], strides = [1, 1]} : vector<8x4xi32> to vector<8x1xi32>
    %c2 = arith.constant 2 : index
    %c0_23 = arith.constant 0 : index
    %c0_24 = arith.constant 0 : index
    %93 = vector.load %arg2[%c2, %c0_23, %c0_24] : memref<4x4x32xf32, #tpu.memory_space<vmem>>, vector<1x4x32xf32>
    %94 = vector.shape_cast %93 : vector<1x4x32xf32> to vector<4x32xf32>
    %cst_25 = arith.constant 0.000000e+00 : f32
    %95 = vector.broadcast %cst_25 : f32 to vector<8x32xf32>
    %96 = vector.extract_strided_slice %94 {offsets = [0, 0], sizes = [1, 32], strides = [1, 1]} : vector<4x32xf32> to vector<1x32xf32>
    %c0_i32_26 = arith.constant 0 : i32
    %97 = vector.broadcast %c0_i32_26 : i32 to vector<8x1xi32>
    %98 = arith.cmpi eq, %92, %97 : vector<8x1xi32>
    %cst_27 = arith.constant 0.000000e+00 : f32
    %99 = vector.shape_cast %98 : vector<8x1xi1> to vector<8x1xi1>
    %100 = vector.broadcast %99 : vector<8x1xi1> to vector<8x32xi1>
    %101 = vector.shape_cast %96 : vector<1x32xf32> to vector<1x32xf32>
    %102 = vector.broadcast %101 : vector<1x32xf32> to vector<8x32xf32>
    %103 = vector.broadcast %cst_27 : f32 to vector<8x32xf32>
    %104 = arith.select %100, %102, %103 : vector<8x32xi1>, vector<8x32xf32>
    %105 = arith.addf %95, %104 : vector<8x32xf32>
    %106 = vector.extract_strided_slice %94 {offsets = [1, 0], sizes = [1, 32], strides = [1, 1]} : vector<4x32xf32> to vector<1x32xf32>
    %c1_i32_28 = arith.constant 1 : i32
    %107 = vector.broadcast %c1_i32_28 : i32 to vector<8x1xi32>
    %108 = arith.cmpi eq, %92, %107 : vector<8x1xi32>
    %cst_29 = arith.constant 0.000000e+00 : f32
    %109 = vector.shape_cast %108 : vector<8x1xi1> to vector<8x1xi1>
    %110 = vector.broadcast %109 : vector<8x1xi1> to vector<8x32xi1>
    %111 = vector.shape_cast %106 : vector<1x32xf32> to vector<1x32xf32>
    %112 = vector.broadcast %111 : vector<1x32xf32> to vector<8x32xf32>
    %113 = vector.broadcast %cst_29 : f32 to vector<8x32xf32>
    %114 = arith.select %110, %112, %113 : vector<8x32xi1>, vector<8x32xf32>
    %115 = arith.addf %105, %114 : vector<8x32xf32>
    %116 = vector.extract_strided_slice %94 {offsets = [2, 0], sizes = [1, 32], strides = [1, 1]} : vector<4x32xf32> to vector<1x32xf32>
    %c2_i32_30 = arith.constant 2 : i32
    %117 = vector.broadcast %c2_i32_30 : i32 to vector<8x1xi32>
    %118 = arith.cmpi eq, %92, %117 : vector<8x1xi32>
    %cst_31 = arith.constant 0.000000e+00 : f32
    %119 = vector.shape_cast %118 : vector<8x1xi1> to vector<8x1xi1>
    %120 = vector.broadcast %119 : vector<8x1xi1> to vector<8x32xi1>
    %121 = vector.shape_cast %116 : vector<1x32xf32> to vector<1x32xf32>
    %122 = vector.broadcast %121 : vector<1x32xf32> to vector<8x32xf32>
    %123 = vector.broadcast %cst_31 : f32 to vector<8x32xf32>
    %124 = arith.select %120, %122, %123 : vector<8x32xi1>, vector<8x32xf32>
    %125 = arith.addf %115, %124 : vector<8x32xf32>
    %126 = vector.extract_strided_slice %94 {offsets = [3, 0], sizes = [1, 32], strides = [1, 1]} : vector<4x32xf32> to vector<1x32xf32>
    %c3_i32_32 = arith.constant 3 : i32
    %127 = vector.broadcast %c3_i32_32 : i32 to vector<8x1xi32>
    %128 = arith.cmpi eq, %92, %127 : vector<8x1xi32>
    %cst_33 = arith.constant 0.000000e+00 : f32
    %129 = vector.shape_cast %128 : vector<8x1xi1> to vector<8x1xi1>
    %130 = vector.broadcast %129 : vector<8x1xi1> to vector<8x32xi1>
    %131 = vector.shape_cast %126 : vector<1x32xf32> to vector<1x32xf32>
    %132 = vector.broadcast %131 : vector<1x32xf32> to vector<8x32xf32>
    %133 = vector.broadcast %cst_33 : f32 to vector<8x32xf32>
    %134 = arith.select %130, %132, %133 : vector<8x32xi1>, vector<8x32xf32>
    %135 = arith.addf %125, %134 : vector<8x32xf32>
    %c0_34 = arith.constant 0 : index
    %c64 = arith.constant 64 : index
    %136 = vector.load %arg3[%c0_34, %c64] : memref<8x128xf32, #tpu.memory_space<vmem>>, vector<8x32xf32>
    tpu.vector_store %arg3[%c0_34, %c64], %135 {strides = array<i32>} : memref<8x128xf32, #tpu.memory_space<vmem>>, vector<8x32xf32>,
    %137 = vector.extract_strided_slice %1 {offsets = [0, 3], sizes = [8, 1], strides = [1, 1]} : vector<8x4xi32> to vector<8x1xi32>
    %c3 = arith.constant 3 : index
    %c0_35 = arith.constant 0 : index
    %c0_36 = arith.constant 0 : index
    %138 = vector.load %arg2[%c3, %c0_35, %c0_36] : memref<4x4x32xf32, #tpu.memory_space<vmem>>, vector<1x4x32xf32>
    %139 = vector.shape_cast %138 : vector<1x4x32xf32> to vector<4x32xf32>
    %cst_37 = arith.constant 0.000000e+00 : f32
    %140 = vector.broadcast %cst_37 : f32 to vector<8x32xf32>
    %141 = vector.extract_strided_slice %139 {offsets = [0, 0], sizes = [1, 32], strides = [1, 1]} : vector<4x32xf32> to vector<1x32xf32>
    %c0_i32_38 = arith.constant 0 : i32
    %142 = vector.broadcast %c0_i32_38 : i32 to vector<8x1xi32>
    %143 = arith.cmpi eq, %137, %142 : vector<8x1xi32>
    %cst_39 = arith.constant 0.000000e+00 : f32
    %144 = vector.shape_cast %143 : vector<8x1xi1> to vector<8x1xi1>
    %145 = vector.broadcast %144 : vector<8x1xi1> to vector<8x32xi1>
    %146 = vector.shape_cast %141 : vector<1x32xf32> to vector<1x32xf32>
    %147 = vector.broadcast %146 : vector<1x32xf32> to vector<8x32xf32>
    %148 = vector.broadcast %cst_39 : f32 to vector<8x32xf32>
    %149 = arith.select %145, %147, %148 : vector<8x32xi1>, vector<8x32xf32>
    %150 = arith.addf %140, %149 : vector<8x32xf32>
    %151 = vector.extract_strided_slice %139 {offsets = [1, 0], sizes = [1, 32], strides = [1, 1]} : vector<4x32xf32> to vector<1x32xf32>
    %c1_i32_40 = arith.constant 1 : i32
    %152 = vector.broadcast %c1_i32_40 : i32 to vector<8x1xi32>
    %153 = arith.cmpi eq, %137, %152 : vector<8x1xi32>
    %cst_41 = arith.constant 0.000000e+00 : f32
    %154 = vector.shape_cast %153 : vector<8x1xi1> to vector<8x1xi1>
    %155 = vector.broadcast %154 : vector<8x1xi1> to vector<8x32xi1>
    %156 = vector.shape_cast %151 : vector<1x32xf32> to vector<1x32xf32>
    %157 = vector.broadcast %156 : vector<1x32xf32> to vector<8x32xf32>
    %158 = vector.broadcast %cst_41 : f32 to vector<8x32xf32>
    %159 = arith.select %155, %157, %158 : vector<8x32xi1>, vector<8x32xf32>
    %160 = arith.addf %150, %159 : vector<8x32xf32>
    %161 = vector.extract_strided_slice %139 {offsets = [2, 0], sizes = [1, 32], strides = [1, 1]} : vector<4x32xf32> to vector<1x32xf32>
    %c2_i32_42 = arith.constant 2 : i32
    %162 = vector.broadcast %c2_i32_42 : i32 to vector<8x1xi32>
    %163 = arith.cmpi eq, %137, %162 : vector<8x1xi32>
    %cst_43 = arith.constant 0.000000e+00 : f32
    %164 = vector.shape_cast %163 : vector<8x1xi1> to vector<8x1xi1>
    %165 = vector.broadcast %164 : vector<8x1xi1> to vector<8x32xi1>
    %166 = vector.shape_cast %161 : vector<1x32xf32> to vector<1x32xf32>
    %167 = vector.broadcast %166 : vector<1x32xf32> to vector<8x32xf32>
    %168 = vector.broadcast %cst_43 : f32 to vector<8x32xf32>
    %169 = arith.select %165, %167, %168 : vector<8x32xi1>, vector<8x32xf32>
    %170 = arith.addf %160, %169 : vector<8x32xf32>
    %171 = vector.extract_strided_slice %139 {offsets = [3, 0], sizes = [1, 32], strides = [1, 1]} : vector<4x32xf32> to vector<1x32xf32>
    %c3_i32_44 = arith.constant 3 : i32
    %172 = vector.broadcast %c3_i32_44 : i32 to vector<8x1xi32>
    %173 = arith.cmpi eq, %137, %172 : vector<8x1xi32>
    %cst_45 = arith.constant 0.000000e+00 : f32
    %174 = vector.shape_cast %173 : vector<8x1xi1> to vector<8x1xi1>
    %175 = vector.broadcast %174 : vector<8x1xi1> to vector<8x32xi1>
    %176 = vector.shape_cast %171 : vector<1x32xf32> to vector<1x32xf32>
    %177 = vector.broadcast %176 : vector<1x32xf32> to vector<8x32xf32>
    %178 = vector.broadcast %cst_45 : f32 to vector<8x32xf32>
    %179 = arith.select %175, %177, %178 : vector<8x32xi1>, vector<8x32xf32>
    %180 = arith.addf %170, %179 : vector<8x32xf32>
    %c0_46 = arith.constant 0 : index
    %c96 = arith.constant 96 : index
    %181 = vector.load %arg3[%c0_46, %c96] : memref<8x128xf32, #tpu.memory_space<vmem>>, vector<8x32xf32>
    tpu.vector_store %arg3[%c0_46, %c96], %180 {strides = array<i32>} : memref<8x128xf32, #tpu.memory_space<vmem>>, vector<8x32xf32>,
    return
  }
  func.func @transform_0(%arg0: i32) -> (i32, i32, i32) {
    %c0_i32 = arith.constant 0 : i32
    %c0_i32_0 = arith.constant 0 : i32
    %c0_i32_1 = arith.constant 0 : i32
    return %arg0, %c0_i32, %c0_i32_0 : i32, i32, i32
  }
  func.func @transform_1(%arg0: i32) -> (i32, i32, i32) {
    %c0_i32 = arith.constant 0 : i32
    %c0_i32_0 = arith.constant 0 : i32
    %c0_i32_1 = arith.constant 0 : i32
    return %arg0, %c0_i32, %c0_i32_0 : i32, i32, i32
  }
  func.func @transform_2(%arg0: i32) -> (i32, i32) {
    %c0_i32 = arith.constant 0 : i32
    %c0_i32_0 = arith.constant 0 : i32
    return %c0_i32, %arg0 : i32, i32
  }
}

</mosaic_0001>

<llo_original>
// kernel: tpu_custom_call.1
$region0: #{tpu_custom_call.1}
  #allocation0 [shape = 'u32[]', space=smem, size = 0x4, offset = 0x4, fixed_abs, tag = 'smem constant byte address 0x4 - core index']
  #allocation1 [shape = 'u32[144,128]{1,0:T(1,128)}', space=vmem, size = 0x12000, scoped, tag = 'internal scratch']
  %s0 = inlined_call_operand.vmem [shape: s32[2,8,4], index: 0, kind: input, shape index: {}]
  %s1 = inlined_call_operand.hbm [shape: f32[8,4,32], index: 1, kind: input, shape index: {}]
  %s2 = inlined_call_operand.hbm [shape: f32[8,256], index: 2, kind: output, shape index: {}]
  %s3 = sld [smem:[#allocation0]]
  $region45: #{tpu_custom_call.1} parent=0
    _
  %s5 = ssub.s32 1, %s3
  %s6 = scalar_select 0, %s5, %s3
  $region1: #{tpu_custom_call.1} parent=0
    #allocation2 [shape = 'u8[16384]{0}', space=vmem, size = 0x4000, scoped, tag = 'input window, operand 1']
    #allocation3 [shape = 's32[2]{0}', space=sflag, size = 0x8, scoped, tag = 'scoped memory for tpu_custom_call.1']
    #allocation4 [shape = 's32[2]{0}', space=sflag, size = 0x8, scoped, tag = 'scoped memory for tpu_custom_call.1']
    #allocation5 [shape = 'u8[8192]{0}', space=vmem, size = 0x2000, scoped, tag = 'output window, operand 0']
    %7 = vsyncpa [#allocation3], 0
    %s8 = scalar_lea.sflag [#allocation3], 1
    %9 = vsyncpa %s8, 0
    %10 = vsyncpa [#allocation4], 0
    %s11 = scalar_lea.sflag [#allocation4], 1
    %12 = vsyncpa %s11, 0
    loop: start=0, step=1, limit=4
    $region2: #{tpu_custom_call.1} parent=1 // loop_pre_header
      _
    $region3: #{tpu_custom_call.1} parent=1 // loop_header
      %s14 = sphi 0, %s18
      %p15 = scmp.ge.s32.totalorder %s14, 4
      %s24 = sphi 0, %s26
      %s27 = sphi 0, %s24
      %s28 = sphi 0, %s27
      %s44 = sphi 0, %s28
      %s50 = sphi 0, %s52
      %s53 = sphi 0, %s50
      %s54 = sphi 0, %s53
      %s70 = sphi 0, %s54
      %s76 = sphi 0, %s78
      %s79 = sphi 0, %s76
      %s80 = sphi 0, %s79
      %s96 = sphi 0, %s80
    $region4: #{tpu_custom_call.1} parent=1 // loop_header_branch
      %17 = sbr.rel (%p15) target = $region8
    $region5: #{tpu_custom_call.1} parent=1 // loop_body
      %s19 = ssub.s32 %s14, 1
      %s20 = ssub.s32 %s14, 2
      %s21 = sadd.s32 %s14, 1
      %s22 = ssub.s32 %s14, %s21
      %p23 = scmp.eq.s32.totalorder %s22, 0
      %s25 = sadd.s32 %s24, 1
      %s26 = scalar_select %p23, %s24, %s25
      %p29 = pneg %p23
      %p30 = scmp.eq.s32.totalorder %s14, 1
      %p31 = por %p29, %p30
      %p32 = scmp.ne.s32.totalorder %s24, %s27
      %p33 = scmp.eq.s32.totalorder %s14, 0
      %p34 = por %p32, %p33
      %p35 = scmp.ne.s32.totalorder %s24, %s27
      %p36 = scmp.eq.s32.totalorder %s19, 1
      %p37 = por %p35, %p36
      %p38 = scmp.ne.s32.totalorder %s27, %s28
      %p39 = scmp.eq.s32.totalorder %s19, 0
      %p40 = por %p38, %p39
      %p41 = scmp.ne.s32.totalorder %s27, %s28
      %p42 = scmp.eq.s32.totalorder %s20, 1
      %p43 = por %p41, %p42
      %p45 = scmp.ne.s32.totalorder %s28, %s44
      %p46 = scmp.eq.s32.totalorder %s20, 0
      %p47 = por %p45, %p46
      %s48 = ssub.s32 %s14, %s21
      %p49 = scmp.eq.s32.totalorder %s48, 0
      %s51 = sadd.s32 %s50, 1
      %s52 = scalar_select %p49, %s50, %s51
      %p55 = pneg %p49
      %p56 = scmp.eq.s32.totalorder %s14, 1
      %p57 = por %p55, %p56
      %p58 = scmp.ne.s32.totalorder %s50, %s53
      %p59 = scmp.eq.s32.totalorder %s14, 0
      %p60 = por %p58, %p59
      %p61 = scmp.ne.s32.totalorder %s50, %s53
      %p62 = scmp.eq.s32.totalorder %s19, 1
      %p63 = por %p61, %p62
      %p64 = scmp.ne.s32.totalorder %s53, %s54
      %p65 = scmp.eq.s32.totalorder %s19, 0
      %p66 = por %p64, %p65
      %p67 = scmp.ne.s32.totalorder %s53, %s54
      %p68 = scmp.eq.s32.totalorder %s20, 1
      %p69 = por %p67, %p68
      %p71 = scmp.ne.s32.totalorder %s54, %s70
      %p72 = scmp.eq.s32.totalorder %s20, 0
      %p73 = por %p71, %p72
      %s74 = ssub.s32 %s14, %s21
      %p75 = scmp.eq.s32.totalorder %s74, 0
      %s77 = sadd.s32 %s76, 1
      %s78 = scalar_select %p75, %s76, %s77
      %p81 = pneg %p75
      %p82 = scmp.eq.s32.totalorder %s14, 1
      %p83 = por %p81, %p82
      %p84 = scmp.ne.s32.totalorder %s76, %s79
      %p85 = scmp.eq.s32.totalorder %s14, 0
      %p86 = por %p84, %p85
      %p87 = scmp.ne.s32.totalorder %s76, %s79
      %p88 = scmp.eq.s32.totalorder %s19, 1
      %p89 = por %p87, %p88
      %p90 = scmp.ne.s32.totalorder %s79, %s80
      %p91 = scmp.eq.s32.totalorder %s19, 0
      %p92 = por %p90, %p91
      %p93 = scmp.ne.s32.totalorder %s79, %s80
      %p94 = scmp.eq.s32.totalorder %s20, 1
      %p95 = por %p93, %p94
      %p97 = scmp.ne.s32.totalorder %s80, %s96
      %p98 = scmp.eq.s32.totalorder %s20, 0
      %p99 = por %p97, %p98
      %p100 = scmp.le.s32.totalorder 1, %s14
      %p101 = scmp.lt.s32.totalorder %s14, 3
      %p102 = pnand %p100, %p101
      %p103 = pneg %p102
      // Predicated region
      $region9: #{tpu_custom_call.1} parent=5 // pred_check
        _
      $region10: #{tpu_custom_call.1} parent=5 // pred_check_branch
        %105 = sbr.rel (%p102) target = $region12
      $region11: #{tpu_custom_call.1} parent=5 // pred_region
        %s106 = ssub.s32 %s14, 1
      $region12: #{tpu_custom_call.1} parent=5 // pred_fallthru
        _
      %p107 = scmp.lt.s32.totalorder %s14, 2
      // Predicated region
      $region13: #{tpu_custom_call.1} parent=5 // pred_check
        %p108 = pneg %p107
      $region14: #{tpu_custom_call.1} parent=5 // pred_check_branch
        %110 = sbr.rel (%p108) target = $region16
      $region15: #{tpu_custom_call.1} parent=5 // pred_region
        // Predicated region
        $region17: #{tpu_custom_call.1} parent=15 // pred_check
          %p111 = pneg %p34
        $region18: #{tpu_custom_call.1} parent=15 // pred_check_branch
          %113 = sbr.rel (%p111) target = $region20
        $region19: #{tpu_custom_call.1} parent=15 // pred_region
          %p114 = scmp.lt.s32.totalorder %s14, 1
          %s115 = scalar_select %p114, %s14, 1
          %s116 = smul.addr %s115, 8
          %s117 = scalar_lea.vmem %s0, %s116
        $region20: #{tpu_custom_call.1} parent=15 // pred_fallthru
          _
        // Predicated region
        $region21: #{tpu_custom_call.1} parent=15 // pred_check
          %p118 = pneg %p60
        $region22: #{tpu_custom_call.1} parent=15 // pred_check_branch
          %120 = sbr.rel (%p118) target = $region24
        $region23: #{tpu_custom_call.1} parent=15 // pred_region
          %s121 = sand.u32 %s50, 1
          %s122 = scalar_lea.sflag [#allocation3], %s121
          %s123 = sand.u32 %s50, 1
          %s124 = smul.addr %s123, 16
          %s125 = scalar_lea.vmem [#allocation2], %s124
          %s126 = smul.u32 4, %s14
          %s128 = ssub.s32 256, 256
          %129 = vsyncadd %s122, %s128
          %s130 = smul.addr %s126, 64
          %s131 = scalar_lea.hbm %s1, %s130
          %s132 = sshll.u32 %s125, 4
          %s133 = int_to_ptr.vmem [resolvable:$true] %s132
          %138 = dma.hbm_to_vmem [thread:$0]  %s131, 256, %s133, %s122, 64, 64, 4
        $region24: #{tpu_custom_call.1} parent=15 // pred_fallthru
          _
      $region16: #{tpu_custom_call.1} parent=5 // pred_fallthru
        _
      %p139 = scmp.le.s32.totalorder 1, %s14
      %p140 = scmp.lt.s32.totalorder %s14, 3
      %p141 = pnand %p139, %p140
      %p142 = pneg %p141
      // Predicated region
      $region25: #{tpu_custom_call.1} parent=5 // pred_check
        _
      $region26: #{tpu_custom_call.1} parent=5 // pred_check_branch
        %144 = sbr.rel (%p141) target = $region28
      $region27: #{tpu_custom_call.1} parent=5 // pred_region
        %s145 = ssub.s32 %s14, 1
        %s146 = sand.u32 %s53, 1
        %s147 = scalar_lea.sflag [#allocation3], %s146
        %s148 = sand.u32 %s53, 1
        %s149 = smul.addr %s148, 16
        %s150 = scalar_lea.vmem [#allocation2], %s149
        // Predicated region
        $region29: #{tpu_custom_call.1} parent=27 // pred_check
          %p151 = pneg %p66
        $region30: #{tpu_custom_call.1} parent=27 // pred_check_branch
          %153 = sbr.rel (%p151) target = $region32
        $region31: #{tpu_custom_call.1} parent=27 // pred_region
          %154 = dma.done %s147, 256
        $region32: #{tpu_custom_call.1} parent=27 // pred_fallthru
          _
        %p155 = scmp.lt.s32.totalorder %s19, 1
        %s156 = scalar_select %p155, %s19, 1
        %s157 = smul.addr %s156, 8
        %s158 = scalar_lea.vmem %s0, %s157
        %p159 = pneg %p40
        %p160 = pneg %p37
        %s161 = sand.u32 %s53, 1
        %s162 = scalar_lea.sflag [#allocation3], %s161
        %s163 = sand.u32 %s53, 1
        %s164 = smul.addr %s163, 16
        %s165 = scalar_lea.vmem [#allocation2], %s164
        %p166 = pneg %p66
        %p167 = pneg %p63
        %p168 = pneg %p92
        %p169 = pneg %p89
        %s170 = sand.u32 %s79, 1
        %s171 = scalar_lea.sflag [#allocation4], %s170
        %s172 = sand.u32 %s79, 1
        %s173 = smul.addr %s172, 8
        %s174 = scalar_lea.vmem [#allocation5], %s173
        %p175 = scmp.lt.s32.totalorder %s19, 1
        %s176 = scalar_select %p175, %s19, 1
        %s177 = smul.addr %s176, 8
        %s178 = scalar_lea.vmem %s0, %s177
        %s179 = smul.u32 4, %s19
        %v180 = vld [vmem:[%s178] sm:$0xff]
        %v181 = vld [vmem:[%s150] sm:$0xf]
        %vm182 = vcmp.eq.s32.totalorder %v180, 0
        %v183 = vsel %vm182, 1, 0
        %184 = vset.pattern.permute.xlu0 0
        %185 = vperm.xlu0 %184, %v183
        %v186 = vpop.permute.xlu0 %185
        %vm187 = vcmp.eq.s32.totalorder %v186, 1
        %v188 = vlaneseq
        %v189 = vshrl.u32 %v188, 7
        %v190 = vsub.s32 0, %v189
        %v191 = vrot.slane %v181, %v190
        %v192 = vsel %vm187, %v191, 0.0
        %v193 = vadd.f32 %v192, 0.0
        %vm194 = vcmp.eq.s32.totalorder %v180, 1
        %v195 = vsel %vm194, 1, 0
        %196 = vset.pattern.permute.xlu0 0
        %197 = vperm.xlu0 %196, %v195
        %v198 = vpop.permute.xlu0 %197
        %vm199 = vcmp.eq.s32.totalorder %v198, 1
        %v200 = vlaneseq
        %v201 = vshrl.u32 %v200, 7
        %v202 = vsub.s32 1, %v201
        %v203 = vrot.slane %v181, %v202
        %v204 = vsel %vm199, %v203, 0.0
        %v205 = vadd.f32 %v193, %v204
        %vm206 = vcmp.eq.s32.totalorder %v180, 2
        %v207 = vsel %vm206, 1, 0
        %208 = vset.pattern.permute.xlu0 0
        %209 = vperm.xlu0 %208, %v207
        %v210 = vpop.permute.xlu0 %209
        %vm211 = vcmp.eq.s32.totalorder %v210, 1
        %v212 = vlaneseq
        %v213 = vshrl.u32 %v212, 7
        %v214 = vsub.s32 2, %v213
        %v215 = vrot.slane %v181, %v214
        %v216 = vsel %vm211, %v215, 0.0
        %v217 = vadd.f32 %v205, %v216
        %vm218 = vcmp.eq.s32.totalorder %v180, 3
        %v219 = vsel %vm218, 1, 0
        %220 = vset.pattern.permute.xlu0 0
        %221 = vperm.xlu0 %220, %v219
        %v222 = vpop.permute.xlu0 %221
        %vm223 = vcmp.eq.s32.totalorder %v222, 1
        %v224 = vlaneseq
        %v225 = vshrl.u32 %v224, 7
        %v226 = vsub.s32 3, %v225
        %v227 = vrot.slane %v181, %v226
        %v228 = vsel %vm223, %v227, 0.0
        %v229 = vadd.f32 %v217, %v228
        %vm230 = vcmask 261120
        %231 = vst.msk [vmem:[%s174] sm:$0xff] %vm230, %v229
        %s232 = scalar_lea.vmem %s150, 4 [#allocation2]
        %v233 = vld [vmem:[%s232] sm:$0xf]
        %234 = vset.pattern.permute.xlu0 1
        %235 = vperm.xlu0 %234, %v183
        %v236 = vpop.permute.xlu0 %235
        %vm237 = vcmp.eq.s32.totalorder %v236, 1
        %v238 = vlaneseq
        %v239 = vshrl.u32 %v238, 7
        %v240 = vsub.s32 0, %v239
        %v241 = vrot.slane %v233, %v240
        %v242 = vsel %vm237, %v241, 0.0
        %v243 = vadd.f32 %v242, 0.0
        %244 = vset.pattern.permute.xlu0 1
        %245 = vperm.xlu0 %244, %v195
        %v246 = vpop.permute.xlu0 %245
        %vm247 = vcmp.eq.s32.totalorder %v246, 1
        %v248 = vlaneseq
        %v249 = vshrl.u32 %v248, 7
        %v250 = vsub.s32 1, %v249
        %v251 = vrot.slane %v233, %v250
        %v252 = vsel %vm247, %v251, 0.0
        %v253 = vadd.f32 %v243, %v252
        %254 = vset.pattern.permute.xlu0 1
        %255 = vperm.xlu0 %254, %v207
        %v256 = vpop.permute.xlu0 %255
        %vm257 = vcmp.eq.s32.totalorder %v256, 1
        %v258 = vlaneseq
        %v259 = vshrl.u32 %v258, 7
        %v260 = vsub.s32 2, %v259
        %v261 = vrot.slane %v233, %v260
        %v262 = vsel %vm257, %v261, 0.0
        %v263 = vadd.f32 %v253, %v262
        %264 = vset.pattern.permute.xlu0 1
        %265 = vperm.xlu0 %264, %v219
        %v266 = vpop.permute.xlu0 %265
        %vm267 = vcmp.eq.s32.totalorder %v266, 1
        %v268 = vlaneseq
        %v269 = vshrl.u32 %v268, 7
        %v270 = vsub.s32 3, %v269
        %v271 = vrot.slane %v233, %v270
        %v272 = vsel %vm267, %v271, 0.0
        %v273 = vadd.f32 %v263, %v272
        %275 = vrot.lane.b32.xlu0 %v273, 32
        %v276 = vpop.permute.xlu0 %275
        %vm278 = vcmask 523520
        %279 = vst.msk [vmem:[%s174] sm:$0xff] %vm278, %v276
        %s280 = scalar_lea.vmem %s150, 8 [#allocation2]
        %v281 = vld [vmem:[%s280] sm:$0xf]
        %282 = vset.pattern.permute.xlu0 2
        %283 = vperm.xlu0 %282, %v183
        %v284 = vpop.permute.xlu0 %283
        %vm285 = vcmp.eq.s32.totalorder %v284, 1
        %v286 = vlaneseq
        %v287 = vshrl.u32 %v286, 7
        %v288 = vsub.s32 0, %v287
        %v289 = vrot.slane %v281, %v288
        %v290 = vsel %vm285, %v289, 0.0
        %v291 = vadd.f32 %v290, 0.0
        %292 = vset.pattern.permute.xlu0 2
        %293 = vperm.xlu0 %292, %v195
        %v294 = vpop.permute.xlu0 %293
        %vm295 = vcmp.eq.s32.totalorder %v294, 1
        %v296 = vlaneseq
        %v297 = vshrl.u32 %v296, 7
        %v298 = vsub.s32 1, %v297
        %v299 = vrot.slane %v281, %v298
        %v300 = vsel %vm295, %v299, 0.0
        %v301 = vadd.f32 %v291, %v300
        %302 = vset.pattern.permute.xlu0 2
        %303 = vperm.xlu0 %302, %v207
        %v304 = vpop.permute.xlu0 %303
        %vm305 = vcmp.eq.s32.totalorder %v304, 1
        %v306 = vlaneseq
        %v307 = vshrl.u32 %v306, 7
        %v308 = vsub.s32 2, %v307
        %v309 = vrot.slane %v281, %v308
        %v310 = vsel %vm305, %v309, 0.0
        %v311 = vadd.f32 %v301, %v310
        %312 = vset.pattern.permute.xlu0 2
        %313 = vperm.xlu0 %312, %v219
        %v314 = vpop.permute.xlu0 %313
        %vm315 = vcmp.eq.s32.totalorder %v314, 1
        %v316 = vlaneseq
        %v317 = vshrl.u32 %v316, 7
        %v318 = vsub.s32 3, %v317
        %v319 = vrot.slane %v281, %v318
        %v320 = vsel %vm315, %v319, 0.0
        %v321 = vadd.f32 %v311, %v320
        %323 = vrot.lane.b32.xlu0 %v321, 64
        %v324 = vpop.permute.xlu0 %323
        %vm326 = vcmask 785920
        %327 = vst.msk [vmem:[%s174] sm:$0xff] %vm326, %v324
        %s328 = scalar_lea.vmem %s150, 12 [#allocation2]
        %v329 = vld [vmem:[%s328] sm:$0xf]
        %330 = vset.pattern.permute.xlu0 3
        %331 = vperm.xlu0 %330, %v183
        %v332 = vpop.permute.xlu0 %331
        %vm333 = vcmp.eq.s32.totalorder %v332, 1
        %v334 = vlaneseq
        %v335 = vshrl.u32 %v334, 7
        %v336 = vsub.s32 0, %v335
        %v337 = vrot.slane %v329, %v336
        %v338 = vsel %vm333, %v337, 0.0
        %v339 = vadd.f32 %v338, 0.0
        %340 = vset.pattern.permute.xlu0 3
        %341 = vperm.xlu0 %340, %v195
        %v342 = vpop.permute.xlu0 %341
        %vm343 = vcmp.eq.s32.totalorder %v342, 1
        %v344 = vlaneseq
        %v345 = vshrl.u32 %v344, 7
        %v346 = vsub.s32 1, %v345
        %v347 = vrot.slane %v329, %v346
        %v348 = vsel %vm343, %v347, 0.0
        %v349 = vadd.f32 %v339, %v348
        %350 = vset.pattern.permute.xlu0 3
        %351 = vperm.xlu0 %350, %v207
        %v352 = vpop.permute.xlu0 %351
        %vm353 = vcmp.eq.s32.totalorder %v352, 1
        %v354 = vlaneseq
        %v355 = vshrl.u32 %v354, 7
        %v356 = vsub.s32 2, %v355
        %v357 = vrot.slane %v329, %v356
        %v358 = vsel %vm353, %v357, 0.0
        %v359 = vadd.f32 %v349, %v358
        %360 = vset.pattern.permute.xlu0 3
        %361 = vperm.xlu0 %360, %v219
        %v362 = vpop.permute.xlu0 %361
        %vm363 = vcmp.eq.s32.totalorder %v362, 1
        %v364 = vlaneseq
        %v365 = vshrl.u32 %v364, 7
        %v366 = vsub.s32 3, %v365
        %v367 = vrot.slane %v329, %v366
        %v368 = vsel %vm363, %v367, 0.0
        %v369 = vadd.f32 %v359, %v368
        %371 = vrot.lane.b32.xlu0 %v369, 96
        %v372 = vpop.permute.xlu0 %371
        %vm374 = vcmask 1048320
        %375 = vst.msk [vmem:[%s174] sm:$0xff] %vm374, %v372
        %s376 = sand.u32 %s79, 1
        %s377 = scalar_lea.sflag [#allocation4], %s376
        %s378 = sand.u32 %s79, 1
        %s379 = smul.addr %s378, 8
        %s380 = scalar_lea.vmem [#allocation5], %s379
        // Predicated region
        $region33: #{tpu_custom_call.1} parent=27 // pred_check
          %p381 = pneg %p89
        $region34: #{tpu_custom_call.1} parent=27 // pred_check_branch
          %383 = sbr.rel (%p381) target = $region36
        $region35: #{tpu_custom_call.1} parent=27 // pred_region
          %s385 = ssub.s32 128, 128
          %386 = vsyncadd %s377, %s385
          %s387 = smul.addr %s19, 128
          %s388 = scalar_lea.hbm %s2, %s387
          %s390 = sshll.u32 %s380, 4
          %s391 = int_to_ptr.vmem [resolvable:$true] %s390
          %393 = dma.vmem_to_hbm [thread:$0]  %s391, 128, %s388, %s377
        $region36: #{tpu_custom_call.1} parent=27 // pred_fallthru
          _
      $region28: #{tpu_custom_call.1} parent=5 // pred_fallthru
        _
      %p394 = scmp.le.s32.totalorder 2, %s14
      // Predicated region
      $region37: #{tpu_custom_call.1} parent=5 // pred_check
        %p395 = pneg %p394
      $region38: #{tpu_custom_call.1} parent=5 // pred_check_branch
        %397 = sbr.rel (%p395) target = $region40
      $region39: #{tpu_custom_call.1} parent=5 // pred_region
        %s398 = ssub.s32 %s14, 2
        // Predicated region
        $region41: #{tpu_custom_call.1} parent=39 // pred_check
          %p399 = pneg %p95
        $region42: #{tpu_custom_call.1} parent=39 // pred_check_branch
          %401 = sbr.rel (%p399) target = $region44
        $region43: #{tpu_custom_call.1} parent=39 // pred_region
          %s402 = sand.u32 %s80, 1
          %s403 = scalar_lea.sflag [#allocation4], %s402
          %s404 = sand.u32 %s80, 1
          %s405 = smul.addr %s404, 8
          %s406 = scalar_lea.vmem [#allocation5], %s405
          %407 = dma.done %s403, 128
        $region44: #{tpu_custom_call.1} parent=39 // pred_fallthru
          _
      $region40: #{tpu_custom_call.1} parent=5 // pred_fallthru
        _
    $region6: #{tpu_custom_call.1} parent=1 // loop_footer
      %s18 = sadd.s32 1, %s14
    $region7: #{tpu_custom_call.1} parent=1 // loop_footer_branch
      %13 = sbr.rel target = $region3
    $region8: #{tpu_custom_call.1} parent=1 // loop_exit
      _
    %408 = vsyncpa [#allocation3], 1
    %s409 = scalar_lea.sflag [#allocation3], 1
    %410 = vsyncpa %s409, 1
    %411 = vsyncpa [#allocation4], 1
    %s412 = scalar_lea.sflag [#allocation4], 1
    %413 = vsyncpa %s412, 1

</llo_original>
